<compile_context>
chip_gen: v7x
topology: tpu7x:2x2x1
jax: 0.10.0
libtpu: 0.0.40
codegen_flags: <defaults>
</compile_context>

<pallas_src>
import functools

import jax
import jax.numpy as jnp
from jax.experimental import pallas as pl
from jax.experimental.pallas import tpu as pltpu


def _round_up(x, m):
    return (x + m - 1) // m * m


# ----------------------------------------------------------------------------
# Pallas kernel: bt batch elements per grid step.
#   x_ref     : (bt, N, C)       f32   VMEM block
#   w_ref     : (C, 2*Cqp + C)   bf16  VMEM block (constant index -> resident)
#   b_ref     : (1, 2*Cqp + C)   f32   VMEM block, fused [bq|pad|bk|pad|bv]
#   gamma_ref : (1, 1)           f32   SMEM
#   o_ref     : (bt, N, C)       f32   VMEM block
# Cqp = Cq rounded up to a multiple of 128 (lane-aligned slice offsets).
# ----------------------------------------------------------------------------
def _fused_attention_kernel(x_ref, w_ref, b_ref, gamma_ref, o_ref):
    x = x_ref[...]                                   # (bt, N, C) f32
    bt, n, c = x.shape
    cqp = (w_ref.shape[1] - c) // 2                  # lane-aligned q/k width

    # Fused q/k/v projection: one bf16 matmul on the whole (bt*N, C) slab.
    xb = x.reshape(bt * n, c).astype(jnp.bfloat16)
    qkv = jnp.dot(xb, w_ref[...],
                  preferred_element_type=jnp.float32) + b_ref[...]   # f32

    # Slices start at 0, cqp, 2*cqp -- all multiples of 128 lanes.
    q = qkv[:, :cqp].reshape(bt, n, cqp)
    k = qkv[:, cqp:2 * cqp].reshape(bt, n, cqp)
    v = qkv[:, 2 * cqp:].reshape(bt, n, c)

    # energy[b, i, j] = <q_i, k_j>; zero-padded q/k columns contribute 0.
    energy = jnp.einsum("bnc,bmc->bnm",
                        q.astype(jnp.bfloat16), k.astype(jnp.bfloat16),
                        preferred_element_type=jnp.float32)          # (bt,N,N)

    # Softmax over last dim (f32); normalization via approx reciprocal (EUP).
    m = jnp.max(energy, axis=-1, keepdims=True)
    p = jnp.exp(energy - m)
    s = jnp.sum(p, axis=-1, keepdims=True)
    attn = p * pl.reciprocal(s, approx=True)

    # out[b, i, c] = sum_j attn[b, i, j] * v[b, j, c]
    out = jnp.einsum("bnm,bmc->bnc",
                     attn.astype(jnp.bfloat16), v.astype(jnp.bfloat16),
                     preferred_element_type=jnp.float32)             # (bt,N,C)

    gamma = gamma_ref[0, 0]
    o_ref[...] = (gamma * out + x).astype(o_ref.dtype)


# ----------------------------------------------------------------------------
# NHWC-native entry point: x_nc is (B, N, C), N = H*W.
# Chained attention blocks should call this directly (no NCHW transposes).
# ----------------------------------------------------------------------------
def self_attention_nhwc(x_nc, wq, bq, wk, bk, wv, bv, gamma):
    B, N, C = x_nc.shape
    Cq = wq.shape[1]
    Cqp = _round_up(Cq, 128)          # lane-align q/k column blocks
    pad = Cqp - Cq
    Dout = 2 * Cqp + C

    # Fused, lane-aligned [wq|0|wk|0|wv]; weights shipped as bf16 (half the
    # weight DMA bytes), biases stay f32 (added post-accumulation).
    wq_p = jnp.pad(wq, ((0, 0), (0, pad)))
    wk_p = jnp.pad(wk, ((0, 0), (0, pad)))
    bq_p = jnp.pad(bq, (0, pad))
    bk_p = jnp.pad(bk, (0, pad))
    w_fused = jnp.concatenate([wq_p, wk_p, wv], axis=1).astype(jnp.bfloat16)
    b_fused = jnp.concatenate([bq_p, bk_p, bv], axis=0).reshape(1, Dout)
    b_fused = b_fused.astype(jnp.float32)
    gamma2d = jnp.asarray(gamma, jnp.float32).reshape(1, 1)

    # >= 2 grid steps when possible so a v7x megacore can shard the batch;
    # for realistic N keep bt*N >= 256 (MXU M fill) when choosing bt.
    bt = B // 2 if (B >= 2 and B % 2 == 0) else B
    grid = (B // bt,)

    out = pl.pallas_call(
        _fused_attention_kernel,
        out_shape=jax.ShapeDtypeStruct((B, N, C), jnp.float32),
        grid_spec=pltpu.PrefetchScalarGridSpec(
            num_scalar_prefetch=0,
            grid=grid,
            in_specs=[
                pl.BlockSpec((bt, N, C), lambda b: (b, 0, 0)),   # x
                pl.BlockSpec((C, Dout), lambda b: (0, 0)),       # fused weight (resident)
                pl.BlockSpec((1, Dout), lambda b: (0, 0)),       # fused bias
                pl.BlockSpec(memory_space=pltpu.SMEM),           # gamma scalar
            ],
            out_specs=pl.BlockSpec((bt, N, C), lambda b: (b, 0, 0)),
        ),
        compiler_params=pltpu.CompilerParams(
            dimension_semantics=("parallel",),     # safe now: no copy-once state
            vmem_limit_bytes=32 * 1024 * 1024,     # re-derive for v7x (64 MiB/TC)
        ),
    )(x_nc, w_fused, b_fused, gamma2d)
    return out


# ----------------------------------------------------------------------------
# NCHW wrapper matching the PyTorch module's layout.
# TODO(synk): in a full ResNet keep activations NHWC across blocks and call
#             self_attention_nhwc directly; these two transposes cost a full
#             HBM round-trip each at real feature-map sizes.
# ----------------------------------------------------------------------------
@jax.jit
def self_attention(x, wq, bq, wk, bk, wv, bv, gamma):
    """x: (B, C, H, W) float32 (NCHW, matching the PyTorch module)."""
    B, C, H, W = x.shape
    N = H * W
    x_nc = jnp.transpose(x, (0, 2, 3, 1)).reshape(B, N, C)
    out = self_attention_nhwc(x_nc, wq, bq, wk, bk, wv, bv, gamma)
    return jnp.transpose(out.reshape(B, H, W, C), (0, 3, 1, 2))


# ----------------------------------------------------------------------------
# Deterministic parameter init.  Weights stored as (Cin, Cout) — the transpose
# of torch's Conv2d weight[:, :, 0, 0].  q/k weights are scaled so the energy
# logits are O(1): keeps softmax well-conditioned so the bf16 kernel can be
# validated against the f32 reference at a few-percent tolerance.
# ----------------------------------------------------------------------------
def init_self_attention_params(key, in_dim):
    cq = in_dim // 8
    kq, kk, kv, kbq, kbk, kbv = jax.random.split(key, 6)
    qk_scale = 1.0 / (float(in_dim) ** 0.5 * float(cq) ** 0.25)
    v_scale = 1.0 / float(in_dim) ** 0.5
    params = {
        "wq": jax.random.normal(kq, (in_dim, cq), jnp.float32) * qk_scale,
        "bq": jax.random.normal(kbq, (cq,), jnp.float32) * 0.01,
        "wk": jax.random.normal(kk, (in_dim, cq), jnp.float32) * qk_scale,
        "bk": jax.random.normal(kbk, (cq,), jnp.float32) * 0.01,
        "wv": jax.random.normal(kv, (in_dim, in_dim), jnp.float32) * v_scale,
        "bv": jax.random.normal(kbv, (in_dim,), jnp.float32) * 0.01,
        # torch init is gamma=0 (output == x trivially); use a nonzero gamma
        # so the attention path is actually exercised.
        "gamma": jnp.float32(0.5),
    }
    return params


# ----------------------------------------------------------------------------
# Pure-JAX f32 reference mirroring the PyTorch math in NCHW (verification).
# ----------------------------------------------------------------------------
def self_attention_reference(x, p):
    B, C, H, W = x.shape
    N = H * W
    xf = x.reshape(B, C, N)

    def conv1x1(w, b):  # w: (Cin, Cout)
        return jnp.einsum("io,bin->bon", w, xf) + b[:, None]

    q = conv1x1(p["wq"], p["bq"])      # (B, Cq, N)
    k = conv1x1(p["wk"], p["bk"])      # (B, Cq, N)
    v = conv1x1(p["wv"], p["bv"])      # (B, C,  N)
    energy = jnp.einsum("bqn,bqm->bnm", q, k)          # (B, N, N)
    attn = jax.nn.softmax(energy, axis=-1)
    out = jnp.einsum("bcm,bnm->bcn", v, attn)          # (B, C, N)
    return p["gamma"] * out.reshape(B, C, H, W) + x


# TODO(synk): ResNet2d.forward also calls self.layer1..layer4, self.avgpool and
# self.keep_avg_pool, none of which are defined in the provided __init__; only
# the four SelfAttention blocks (the defined compute) are implemented here.
if __name__ == "__main__":
    key = jax.random.PRNGKey(0)
    B, H, W = 2, 4, 4
    attention_dims = [64, 160, 320, 640]   # attention1..attention4

    last = None
    for C in attention_dims:
        key, kx, kp = jax.random.split(key, 3)
        x = jax.random.normal(kx, (B, C, H, W), jnp.float32)
        p = init_self_attention_params(kp, C)

        y = self_attention(x, p["wq"], p["bq"], p["wk"], p["bk"],
                           p["wv"], p["bv"], p["gamma"])
        y = jax.block_until_ready(y)
        y_ref = self_attention_reference(x, p)

        max_err = float(jnp.max(jnp.abs(y - y_ref)))
        assert y.shape == x.shape and y.dtype == jnp.float32
        # bf16 MXU operands + approx reciprocal -> loosened tolerance vs. the
        # f32 reference (expected precision loss; structural bugs would be O(1)).
        assert jnp.allclose(y, y_ref, atol=5e-2, rtol=5e-2), (
            f"mismatch for C={C}: max err {max_err}")
        last = y

    # final flatten as in ResNet2d.forward: x.view(x.size(0), -1)
    flat = last.reshape(last.shape[0], -1)
    jax.block_until_ready(flat)
    print("KERNEL_OK")
</pallas_src>

<mosaic_0001>
module attributes {stable_mosaic.version = 11 : i64} {
  func.func @_fused_attention_kernel(%arg0: i32, %arg1: memref<1x16x64xf32, #tpu.memory_space<vmem>>, %arg2: memref<64x320xbf16, #tpu.memory_space<vmem>>, %arg3: memref<1x320xf32, #tpu.memory_space<vmem>>, %arg4: memref<1x1xf32, #tpu.memory_space<smem>>, %arg5: memref<1x16x64xf32, #tpu.memory_space<vmem>>) attributes {dimension_semantics = [#tpu.dimension_semantics<parallel>], iteration_bounds = array<i64: 2>, scalar_prefetch = 0 : i64, scratch_operands = 0 : i64, tpu.core_type = #tpu.core_type<tc>, window_params = [{transform_indices = @transform_0, window_bounds = array<i64: 1, 16, 64>}, {pipeline_mode = #tpu.pipeline_mode<synchronous>, transform_indices = @transform_1, window_bounds = array<i64: 64, 320>}, {pipeline_mode = #tpu.pipeline_mode<synchronous>, transform_indices = @transform_2, window_bounds = array<i64: 1, 320>}, {transform_indices = @transform_3, window_bounds = array<i64: 1, 1>}, {transform_indices = @transform_4, window_bounds = array<i64: 1, 16, 64>}]} {
    %c0 = arith.constant 0 : index
    %c0_0 = arith.constant 0 : index
    %c0_1 = arith.constant 0 : index
    %0 = vector.load %arg1[%c0, %c0_0, %c0_1] : memref<1x16x64xf32, #tpu.memory_space<vmem>>, vector<1x16x64xf32>
    %1 = vector.shape_cast %0 : vector<1x16x64xf32> to vector<16x64xf32>
    %2 = arith.truncf %1 : vector<16x64xf32> to vector<16x64xbf16>
    %c0_2 = arith.constant 0 : index
    %c0_3 = arith.constant 0 : index
    %3 = vector.load %arg2[%c0_2, %c0_3] : memref<64x320xbf16, #tpu.memory_space<vmem>>, vector<64x320xbf16>
    %cst = arith.constant dense<0.000000e+00> : vector<16x320xf32>
    %4 = tpu.matmul %2, %3, %cst {dimension_numbers = #tpu.dot_dimension_numbers<[1], [0], [0], [1], [0, 0, 1, 1], [], []>} : vector<16x64xbf16>, vector<64x320xbf16>, vector<16x320xf32> -> vector<16x320xf32>
    %c0_4 = arith.constant 0 : index
    %c0_5 = arith.constant 0 : index
    %5 = vector.load %arg3[%c0_4, %c0_5] : memref<1x320xf32, #tpu.memory_space<vmem>>, vector<1x320xf32>
    %6 = vector.broadcast %5 : vector<1x320xf32> to vector<16x320xf32>
    %7 = arith.addf %4, %6 : vector<16x320xf32>
    %8 = vector.extract_strided_slice %7 {offsets = [0, 0], sizes = [16, 128], strides = [1, 1]} : vector<16x320xf32> to vector<16x128xf32>
    %9 = vector.shape_cast %8 : vector<16x128xf32> to vector<1x16x128xf32>
    %10 = vector.extract_strided_slice %7 {offsets = [0, 128], sizes = [16, 128], strides = [1, 1]} : vector<16x320xf32> to vector<16x128xf32>
    %11 = vector.shape_cast %10 : vector<16x128xf32> to vector<1x16x128xf32>
    %12 = vector.extract_strided_slice %7 {offsets = [0, 256], sizes = [16, 64], strides = [1, 1]} : vector<16x320xf32> to vector<16x64xf32>
    %13 = vector.shape_cast %12 : vector<16x64xf32> to vector<1x16x64xf32>
    %14 = arith.truncf %9 : vector<1x16x128xf32> to vector<1x16x128xbf16>
    %15 = arith.truncf %11 : vector<1x16x128xf32> to vector<1x16x128xbf16>
    "tpu.trace_start"() <{level = 10 : i32, message = "bnc,bmc->bnm"}> : () -> ()
    %cst_6 = arith.constant dense<0.000000e+00> : vector<1x16x16xf32>
    %16 = tpu.matmul %14, %15, %cst_6 {dimension_numbers = #tpu.dot_dimension_numbers<[2], [2], [1], [1], [0, 0, 0, 1, 1, 1], [0], [0]>} : vector<1x16x128xbf16>, vector<1x16x128xbf16>, vector<1x16x16xf32> -> vector<1x16x16xf32>
    "tpu.trace_stop"() : () -> ()
    %cst_7 = arith.constant dense<0xFF800000> : vector<1x16xf32>
    %17 = vector.multi_reduction <maximumf>, %16, %cst_7 [2] : vector<1x16x16xf32> to vector<1x16xf32>
    %18 = vector.shape_cast %17 : vector<1x16xf32> to vector<1x16x1xf32>
    %19 = vector.broadcast %18 : vector<1x16x1xf32> to vector<1x16x16xf32>
    %20 = arith.subf %16, %19 : vector<1x16x16xf32>
    %21 = math.exp %20 : vector<1x16x16xf32>
    %cst_8 = arith.constant dense<0.000000e+00> : vector<1x16xf32>
    %22 = vector.multi_reduction <add>, %21, %cst_8 [2] : vector<1x16x16xf32> to vector<1x16xf32>
    %23 = vector.shape_cast %22 : vector<1x16xf32> to vector<1x16x1xf32>
    %24 = tpu.reciprocal %23 {approx = true} : vector<1x16x1xf32> -> vector<1x16x1xf32>
    %25 = vector.broadcast %24 : vector<1x16x1xf32> to vector<1x16x16xf32>
    %26 = arith.mulf %21, %25 : vector<1x16x16xf32>
    %27 = arith.truncf %26 : vector<1x16x16xf32> to vector<1x16x16xbf16>
    %28 = arith.truncf %13 : vector<1x16x64xf32> to vector<1x16x64xbf16>
    "tpu.trace_start"() <{level = 10 : i32, message = "bnm,bmc->bnc"}> : () -> ()
    %cst_9 = arith.constant dense<0.000000e+00> : vector<1x16x64xf32>
    %29 = tpu.matmul %27, %28, %cst_9 {dimension_numbers = #tpu.dot_dimension_numbers<[2], [1], [1], [2], [0, 0, 0, 1, 1, 2], [0], [0]>} : vector<1x16x16xbf16>, vector<1x16x64xbf16>, vector<1x16x64xf32> -> vector<1x16x64xf32>
    "tpu.trace_stop"() : () -> ()
    %c0_10 = arith.constant 0 : index
    %c0_11 = arith.constant 0 : index
    %30 = memref.load %arg4[%c0_10, %c0_11] : memref<1x1xf32, #tpu.memory_space<smem>>
    %31 = vector.broadcast %30 : f32 to vector<1x16x64xf32>
    %32 = arith.mulf %31, %29 : vector<1x16x64xf32>
    %33 = arith.addf %32, %0 : vector<1x16x64xf32>
    %c0_12 = arith.constant 0 : index
    %c0_13 = arith.constant 0 : index
    %c0_14 = arith.constant 0 : index
    %34 = vector.load %arg5[%c0_12, %c0_13, %c0_14] : memref<1x16x64xf32, #tpu.memory_space<vmem>>, vector<1x16x64xf32>
    tpu.vector_store %arg5[%c0_12, %c0_13, %c0_14], %33 {strides = array<i32>} : memref<1x16x64xf32, #tpu.memory_space<vmem>>, vector<1x16x64xf32>,
    return
  }
  func.func @transform_0(%arg0: i32) -> (i32, i32, i32) {
    %c0_i32 = arith.constant 0 : i32
    %c0_i32_0 = arith.constant 0 : i32
    %c0_i32_1 = arith.constant 0 : i32
    return %arg0, %c0_i32, %c0_i32_0 : i32, i32, i32
  }
  func.func @transform_1(%arg0: i32) -> (i32, i32) {
    %c0_i32 = arith.constant 0 : i32
    %c0_i32_0 = arith.constant 0 : i32
    %c0_i32_1 = arith.constant 0 : i32
    return %c0_i32, %c0_i32_0 : i32, i32
  }
  func.func @transform_2(%arg0: i32) -> (i32, i32) {
    %c0_i32 = arith.constant 0 : i32
    %c0_i32_0 = arith.constant 0 : i32
    %c0_i32_1 = arith.constant 0 : i32
    return %c0_i32, %c0_i32_0 : i32, i32
  }
  func.func @transform_3(%arg0: i32) -> (i32, i32) {
    %c0_i32 = arith.constant 0 : i32
    %c0_i32_0 = arith.constant 0 : i32
    %c0_i32_1 = arith.constant 0 : i32
    return %c0_i32, %c0_i32_0 : i32, i32
  }
  func.func @transform_4(%arg0: i32) -> (i32, i32, i32) {
    %c0_i32 = arith.constant 0 : i32
    %c0_i32_0 = arith.constant 0 : i32
    %c0_i32_1 = arith.constant 0 : i32
    return %arg0, %c0_i32, %c0_i32_0 : i32, i32, i32
  }
}

</mosaic_0001>

<llo_original>
// kernel: self_attention.1
$region0: #{self_attention.1}
  #allocation0 [shape = 'u32[]', space=smem, size = 0x4, offset = 0x4, fixed_abs, tag = 'smem constant byte address 0x4 - core index']
  #allocation1 [shape = 'u32[144,128]{1,0:T(1,128)}', space=vmem, size = 0x12000, scoped, tag = 'internal scratch']
  #allocation2 [shape = 'f32[1,1]{1,0:T(1,128)S(6)}', space=smem, size = 0x200, scoped, tag = 'scoped memory for self_attention.1']
  %s0 = inlined_call_operand.vmem [shape: f32[2,16,64], index: 0, kind: input, shape index: {}]
  %s1 = inlined_call_operand.vmem [shape: bf16[64,320], index: 1, kind: input, shape index: {}]
  %s2 = inlined_call_operand.vmem [shape: f32[1,320], index: 2, kind: input, shape index: {}]
  %s3 = inlined_call_operand.<no memory space> [shape: f32[1,1], index: 3, kind: input, shape index: {}]
  %s4 = inlined_call_operand.hbm [shape: f32[2,16,64], index: 4, kind: output, shape index: {}]
  %s5 = sld [smem:[#allocation0]]
  $region49: #{self_attention.1} parent=0
    _
  %s7 = ssub.s32 1, %s5
  %s8 = scalar_select 0, %s7, %s5
  %9 = sst [smem:[#allocation2]] %s3
  $region1: #{self_attention.1} parent=0
    #allocation3 [shape = 'u8[16384]{0}', space=vmem, size = 0x4000, scoped, tag = 'output window, operand 0']
    #allocation4 [shape = 's32[2]{0}', space=sflag, size = 0x8, scoped, tag = 'scoped memory for self_attention.1']
    %10 = vsyncpa [#allocation4], 0
    %s11 = scalar_lea.sflag [#allocation4], 1
    %12 = vsyncpa %s11, 0
    loop: start=0, step=1, limit=4
    $region2: #{self_attention.1} parent=1 // loop_pre_header
      _
    $region3: #{self_attention.1} parent=1 // loop_header
      %s14 = sphi 0, %s18
      %p15 = scmp.ge.s32.totalorder %s14, 4
      %s24 = sphi 0, %s26
      %s27 = sphi 0, %s24
      %s28 = sphi 0, %s27
      %s44 = sphi 0, %s28
      %s48 = sphi 0, %s48
      %s50 = sphi 0, %s48
      %s51 = sphi 0, %s50
      %s65 = sphi 0, %s51
      %s69 = sphi 0, %s69
      %s71 = sphi 0, %s69
      %s72 = sphi 0, %s71
      %s86 = sphi 0, %s72
      %s90 = sphi 0, %s90
      %s92 = sphi 0, %s90
      %s93 = sphi 0, %s92
      %s107 = sphi 0, %s93
      %s113 = sphi 0, %s115
      %s116 = sphi 0, %s113
      %s117 = sphi 0, %s116
      %s133 = sphi 0, %s117
    $region4: #{self_attention.1} parent=1 // loop_header_branch
      %17 = sbr.rel (%p15) target = $region8
    $region5: #{self_attention.1} parent=1 // loop_body
      %s19 = ssub.s32 %s14, 1
      %s20 = ssub.s32 %s14, 2
      %s21 = sadd.s32 %s14, 1
      %s22 = ssub.s32 %s14, %s21
      %p23 = scmp.eq.s32.totalorder %s22, 0
      %s25 = sadd.s32 %s24, 1
      %s26 = scalar_select %p23, %s24, %s25
      %p29 = pneg %p23
      %p30 = scmp.eq.s32.totalorder %s14, 1
      %p31 = por %p29, %p30
      %p32 = scmp.ne.s32.totalorder %s24, %s27
      %p33 = scmp.eq.s32.totalorder %s14, 0
      %p34 = por %p32, %p33
      %p35 = scmp.ne.s32.totalorder %s24, %s27
      %p36 = scmp.eq.s32.totalorder %s19, 1
      %p37 = por %p35, %p36
      %p38 = scmp.ne.s32.totalorder %s27, %s28
      %p39 = scmp.eq.s32.totalorder %s19, 0
      %p40 = por %p38, %p39
      %p41 = scmp.ne.s32.totalorder %s27, %s28
      %p42 = scmp.eq.s32.totalorder %s20, 1
      %p43 = por %p41, %p42
      %p45 = scmp.ne.s32.totalorder %s28, %s44
      %p46 = scmp.eq.s32.totalorder %s20, 0
      %p47 = por %p45, %p46
      %s49 = sadd.s32 %s48, 1
      %p52 = scmp.eq.s32.totalorder %s14, 1
      %p53 = scmp.ne.s32.totalorder %s48, %s50
      %p54 = scmp.eq.s32.totalorder %s14, 0
      %p55 = por %p53, %p54
      %p56 = scmp.ne.s32.totalorder %s48, %s50
      %p57 = scmp.eq.s32.totalorder %s19, 1
      %p58 = por %p56, %p57
      %p59 = scmp.ne.s32.totalorder %s50, %s51
      %p60 = scmp.eq.s32.totalorder %s19, 0
      %p61 = por %p59, %p60
      %p62 = scmp.ne.s32.totalorder %s50, %s51
      %p63 = scmp.eq.s32.totalorder %s20, 1
      %p64 = por %p62, %p63
      %p66 = scmp.ne.s32.totalorder %s51, %s65
      %p67 = scmp.eq.s32.totalorder %s20, 0
      %p68 = por %p66, %p67
      %s70 = sadd.s32 %s69, 1
      %p73 = scmp.eq.s32.totalorder %s14, 1
      %p74 = scmp.ne.s32.totalorder %s69, %s71
      %p75 = scmp.eq.s32.totalorder %s14, 0
      %p76 = por %p74, %p75
      %p77 = scmp.ne.s32.totalorder %s69, %s71
      %p78 = scmp.eq.s32.totalorder %s19, 1
      %p79 = por %p77, %p78
      %p80 = scmp.ne.s32.totalorder %s71, %s72
      %p81 = scmp.eq.s32.totalorder %s19, 0
      %p82 = por %p80, %p81
      %p83 = scmp.ne.s32.totalorder %s71, %s72
      %p84 = scmp.eq.s32.totalorder %s20, 1
      %p85 = por %p83, %p84
      %p87 = scmp.ne.s32.totalorder %s72, %s86
      %p88 = scmp.eq.s32.totalorder %s20, 0
      %p89 = por %p87, %p88
      %s91 = sadd.s32 %s90, 1
      %p94 = scmp.eq.s32.totalorder %s14, 1
      %p95 = scmp.ne.s32.totalorder %s90, %s92
      %p96 = scmp.eq.s32.totalorder %s14, 0
      %p97 = por %p95, %p96
      %p98 = scmp.ne.s32.totalorder %s90, %s92
      %p99 = scmp.eq.s32.totalorder %s19, 1
      %p100 = por %p98, %p99
      %p101 = scmp.ne.s32.totalorder %s92, %s93
      %p102 = scmp.eq.s32.totalorder %s19, 0
      %p103 = por %p101, %p102
      %p104 = scmp.ne.s32.totalorder %s92, %s93
      %p105 = scmp.eq.s32.totalorder %s20, 1
      %p106 = por %p104, %p105
      %p108 = scmp.ne.s32.totalorder %s93, %s107
      %p109 = scmp.eq.s32.totalorder %s20, 0
      %p110 = por %p108, %p109
      %s111 = ssub.s32 %s14, %s21
      %p112 = scmp.eq.s32.totalorder %s111, 0
      %s114 = sadd.s32 %s113, 1
      %s115 = scalar_select %p112, %s113, %s114
      %p118 = pneg %p112
      %p119 = scmp.eq.s32.totalorder %s14, 1
      %p120 = por %p118, %p119
      %p121 = scmp.ne.s32.totalorder %s113, %s116
      %p122 = scmp.eq.s32.totalorder %s14, 0
      %p123 = por %p121, %p122
      %p124 = scmp.ne.s32.totalorder %s113, %s116
      %p125 = scmp.eq.s32.totalorder %s19, 1
      %p126 = por %p124, %p125
      %p127 = scmp.ne.s32.totalorder %s116, %s117
      %p128 = scmp.eq.s32.totalorder %s19, 0
      %p129 = por %p127, %p128
      %p130 = scmp.ne.s32.totalorder %s116, %s117
      %p131 = scmp.eq.s32.totalorder %s20, 1
      %p132 = por %p130, %p131
      %p134 = scmp.ne.s32.totalorder %s117, %s133
      %p135 = scmp.eq.s32.totalorder %s20, 0
      %p136 = por %p134, %p135
      %p137 = scmp.le.s32.totalorder 1, %s14
      %p138 = scmp.lt.s32.totalorder %s14, 3
      %p139 = pnand %p137, %p138
      %p140 = pneg %p139
      // Predicated region
      $region9: #{self_attention.1} parent=5 // pred_check
        _
      $region10: #{self_attention.1} parent=5 // pred_check_branch
        %142 = sbr.rel (%p139) target = $region12
      $region11: #{self_attention.1} parent=5 // pred_region
        %s143 = ssub.s32 %s14, 1
        // Predicated region
        $region13: #{self_attention.1} parent=11 // pred_check
          %p144 = pneg %p61
        $region14: #{self_attention.1} parent=11 // pred_check_branch
          %146 = sbr.rel (%p144) target = $region16
        $region15: #{self_attention.1} parent=11 // pred_region
          _
        $region16: #{self_attention.1} parent=11 // pred_fallthru
          _
        // Predicated region
        $region17: #{self_attention.1} parent=11 // pred_check
          %p147 = pneg %p82
        $region18: #{self_attention.1} parent=11 // pred_check_branch
          %149 = sbr.rel (%p147) target = $region20
        $region19: #{self_attention.1} parent=11 // pred_region
          _
        $region20: #{self_attention.1} parent=11 // pred_fallthru
          _
        // Predicated region
        $region21: #{self_attention.1} parent=11 // pred_check
          %p150 = pneg %p103
        $region22: #{self_attention.1} parent=11 // pred_check_branch
          %152 = sbr.rel (%p150) target = $region24
        $region23: #{self_attention.1} parent=11 // pred_region
          _
        $region24: #{self_attention.1} parent=11 // pred_fallthru
          _
      $region12: #{self_attention.1} parent=5 // pred_fallthru
        _
      %p153 = scmp.lt.s32.totalorder %s14, 2
      // Predicated region
      $region25: #{self_attention.1} parent=5 // pred_check
        %p154 = pneg %p153
      $region26: #{self_attention.1} parent=5 // pred_check_branch
        %156 = sbr.rel (%p154) target = $region28
      $region27: #{self_attention.1} parent=5 // pred_region
        // Predicated region
        $region29: #{self_attention.1} parent=27 // pred_check
          %p157 = pneg %p34
        $region30: #{self_attention.1} parent=27 // pred_check_branch
          %159 = sbr.rel (%p157) target = $region32
        $region31: #{self_attention.1} parent=27 // pred_region
          %p160 = scmp.lt.s32.totalorder %s14, 1
          %s161 = scalar_select %p160, %s14, 1
          %s162 = smul.addr %s161, 2
          %s163 = smul.addr %s162, 8
          %s164 = scalar_lea.vmem %s0, %s163
        $region32: #{self_attention.1} parent=27 // pred_fallthru
          _
      $region28: #{self_attention.1} parent=5 // pred_fallthru
        _
      %p165 = scmp.le.s32.totalorder 1, %s14
      %p166 = scmp.lt.s32.totalorder %s14, 3
      %p167 = pnand %p165, %p166
      %p168 = pneg %p167
      // Predicated region
      $region33: #{self_attention.1} parent=5 // pred_check
        _
      $region34: #{self_attention.1} parent=5 // pred_check_branch
        %170 = sbr.rel (%p167) target = $region36
      $region35: #{self_attention.1} parent=5 // pred_region
        %s171 = ssub.s32 %s14, 1
        %p172 = scmp.lt.s32.totalorder %s19, 1
        %s173 = scalar_select %p172, %s19, 1
        %s174 = smul.addr %s173, 2
        %s175 = smul.addr %s174, 8
        %s176 = scalar_lea.vmem %s0, %s175
        %p177 = pneg %p40
        %p178 = pneg %p37
        %p179 = pneg %p61
        %p180 = pneg %p58
        %p181 = pneg %p82
        %p182 = pneg %p79
        %p183 = pneg %p103
        %p184 = pneg %p100
        %p185 = pneg %p129
        %p186 = pneg %p126
        %s187 = sand.u32 %s116, 1
        %s188 = scalar_lea.sflag [#allocation4], %s187
        %s189 = sand.u32 %s116, 1
        %s190 = smul.addr %s189, 16
        %s191 = scalar_lea.vmem [#allocation3], %s190
        %p192 = scmp.lt.s32.totalorder %s19, 1
        %s193 = scalar_select %p192, %s19, 1
        %s194 = smul.addr %s193, 2
        %s195 = smul.addr %s194, 8
        %s196 = scalar_lea.vmem %s0, %s195
        %v198 = vld [vmem:[%s196] sm:$0xff]
        %v199 = vld [vmem:[%s196 + $0x8] sm:$0xff]
        %v200 = vpack.c.bf16 %v199, %v198
        %v201 = vld [vmem:[%s1] sm:$0xff]
        %v202 = vld [vmem:[%s1 + $0x8] sm:$0xf]
        %v203 = vld [vmem:[%s1 + $0xc] sm:$0xff]
        %v204 = vld [vmem:[%s1 + $0x14] sm:$0xf]
        %v205 = vld [vmem:[%s1 + $0x18] sm:$0xff]
        %v206 = vld [vmem:[%s1 + $0x20] sm:$0xf]
        %v207 = vld [vmem:[%s1 + $0x24] sm:$0xff]
        %v208 = vld [vmem:[%s1 + $0x2c] sm:$0xf]
        %v209 = vld [vmem:[%s1 + $0x30] sm:$0xff]
        %v210 = vld [vmem:[%s1 + $0x38] sm:$0xf]
        %v211 = vld [vmem:[%s1 + $0x3c] sm:$0xff]
        %v212 = vld [vmem:[%s1 + $0x44] sm:$0xf]
        %v213 = vld [vmem:[%s1 + $0x48] sm:$0xff]
        %v214 = vld [vmem:[%s1 + $0x50] sm:$0xf]
        %v215 = vld [vmem:[%s1 + $0x54] sm:$0xff]
        %v216 = vld [vmem:[%s1 + $0x5c] sm:$0xf]
        %v217 = vld [vmem:[%s2] sm:$0x7]
        %v219 = vlaneseq
        %v220 = vshrl.u32 %v219, 7
        %v221 = vsub.s32 0, %v220
        %v222 = vrot.slane %v217, %v221
        %v223 = vlaneseq
        %v224 = vshrl.u32 %v223, 7
        %v225 = vsub.s32 1, %v224
        %v226 = vrot.slane %v217, %v225
        %v227 = vlaneseq
        %v228 = vshrl.u32 %v227, 7
        %v229 = vsub.s32 2, %v228
        %v230 = vrot.slane %v217, %v229
        %v250 = vunpack.c.l.b16 %v201
        %v251 = vunpack.c.h.b16 %v201
        %v252 = vunpack.c.l.b16 %v202
        %v253 = vunpack.c.l.b16 %v203
        %v254 = vunpack.c.h.b16 %v203
        %v255 = vunpack.c.l.b16 %v204
        %v256 = vunpack.c.l.b16 %v205
        %v257 = vunpack.c.h.b16 %v205
        %v258 = vunpack.c.l.b16 %v206
        %v259 = vunpack.c.l.b16 %v207
        %v260 = vunpack.c.h.b16 %v207
        %v261 = vunpack.c.l.b16 %v208
        %v262 = vunpack.c.l.b16 %v209
        %v263 = vunpack.c.h.b16 %v209
        %v264 = vunpack.c.l.b16 %v210
        %v265 = vunpack.c.l.b16 %v211
        %v266 = vunpack.c.h.b16 %v211
        %v267 = vunpack.c.l.b16 %v212
        %v268 = vunpack.c.l.b16 %v213
        %v269 = vunpack.c.h.b16 %v213
        %v270 = vunpack.c.l.b16 %v214
        %v271 = vunpack.c.l.b16 %v215
        %v272 = vunpack.c.h.b16 %v215
        %v273 = vunpack.c.l.b16 %v216
        %v274 = vpack.c.b16 %v253, %v250
        %v275 = vpack.c.b16 %v254, %v251
        %v276 = vpack.c.b16 %v255, %v252
        %v277 = vpack.c.b16 %v259, %v256
        %v278 = vpack.c.b16 %v260, %v257
        %v279 = vpack.c.b16 %v261, %v258
        %v280 = vpack.c.b16 %v265, %v262
        %v281 = vpack.c.b16 %v266, %v263
        %v282 = vpack.c.b16 %v267, %v264
        %v283 = vpack.c.b16 %v271, %v268
        %v284 = vpack.c.b16 %v272, %v269
        %v285 = vpack.c.b16 %v273, %v270
        %vm298 = vcmask 523264
        %v300 = vsel %vm298, %v200, 0
        %302 = vmatprep.subr.bf16.mxu0 %v275
        %303 = vmatpush1.bf16.msra.mxu0 %v274
        %304 = vmatprep.subr.bf16.mxu0 %v278
        %305 = vmatpush1.bf16.msra.mxu0 %v277
        %306 = vmatprep.subr.bf16.mxu0 %v281
        %307 = vmatpush1.bf16.msra.mxu0 %v280
        %308 = vmatprep.subr.bf16.mxu0 %v284
        %309 = vmatpush1.bf16.msra.mxu0 %v283
        %310 = vmatprep.subr.bf16.mxu0 0
        %311 = vmatpush1.bf16.msra.mxu0 0
        %312 = vmatprep.subr.bf16.mxu0 0
        %313 = vmatpush1.bf16.msra.mxu0 0
        %314 = vmatprep.subr.bf16.mxu0 0
        %315 = vmatpush1.bf16.msra.mxu0 0
        %316 = vmatprep.subr.bf16.mxu0 0
        %317 = vmatpush1.bf16.msra.mxu0 0
        %318 = vmatprep.subr.bf16.mxu0 0
        %319 = vmatpush1.bf16.msra.mxu0 0
        %320 = vmatprep.subr.bf16.mxu0 0
        %321 = vmatpush1.bf16.msra.mxu0 0
        %322 = vmatprep.subr.bf16.mxu0 0
        %323 = vmatpush1.bf16.msra.mxu0 0
        %324 = vmatprep.subr.bf16.mxu0 0
        %325 = vmatpush1.bf16.msra.mxu0 0
        %326 = vmatprep.subr.bf16.mxu0 0
        %327 = vmatpush1.bf16.msra.mxu0 0
        %328 = vmatprep.subr.bf16.mxu0 0
        %329 = vmatpush1.bf16.msra.mxu0 0
        %330 = vmatprep.subr.bf16.mxu0 0
        %331 = vmatpush1.bf16.msra.mxu0 0
        %332 = vmatprep.subr.bf16.mxu0 0
        %333 = vmatpush1.bf16.msra.mxu0 0
        %334 = vmatprep.mubr.bf16.mxu0 0
        %335 = vmatmul.mubr.bf16.gmra.mrb[0].mxu0 %v300
        %v336 = vpop.f32.mrb[0].mxu0
        %v337 = vadd.f32 %v222, %v336
        %v338 = vpop.f32.mrb[0].mxu0
        %v339 = vadd.f32 %v226, %v338
        %v340 = vpop.f32.mrb[0].mxu0
        %v341 = vadd.f32 %v222, %v340
        %v342 = vpop.f32.mrb[0].mxu0
        %v343 = vadd.f32 %v226, %v342
        %344 = vdwg.mxu0
        %345 = vmatprep.subr.bf16.mxu0 0
        %346 = vmatpush1.bf16.msra.mxu0 %v276
        %347 = vmatprep.subr.bf16.mxu0 0
        %348 = vmatpush1.bf16.msra.mxu0 %v279
        %349 = vmatprep.subr.bf16.mxu0 0
        %350 = vmatpush1.bf16.msra.mxu0 %v282
        %351 = vmatprep.subr.bf16.mxu0 0
        %352 = vmatpush1.bf16.msra.mxu0 %v285
        %353 = vmatprep.subr.bf16.mxu0 0
        %354 = vmatpush1.bf16.msra.mxu0 0
        %355 = vmatprep.subr.bf16.mxu0 0
        %356 = vmatpush1.bf16.msra.mxu0 0
        %357 = vmatprep.subr.bf16.mxu0 0
        %358 = vmatpush1.bf16.msra.mxu0 0
        %359 = vmatprep.subr.bf16.mxu0 0
        %360 = vmatpush1.bf16.msra.mxu0 0
        %361 = vmatprep.subr.bf16.mxu0 0
        %362 = vmatpush1.bf16.msra.mxu0 0
        %363 = vmatprep.subr.bf16.mxu0 0
        %364 = vmatpush1.bf16.msra.mxu0 0
        %365 = vmatprep.subr.bf16.mxu0 0
        %366 = vmatpush1.bf16.msra.mxu0 0
        %367 = vmatprep.subr.bf16.mxu0 0
        %368 = vmatpush1.bf16.msra.mxu0 0
        %369 = vmatprep.subr.bf16.mxu0 0
        %370 = vmatpush1.bf16.msra.mxu0 0
        %371 = vmatprep.subr.bf16.mxu0 0
        %372 = vmatpush1.bf16.msra.mxu0 0
        %373 = vmatprep.subr.bf16.mxu0 0
        %374 = vmatpush1.bf16.msra.mxu0 0
        %375 = vmatprep.subr.bf16.mxu0 0
        %376 = vmatpush1.bf16.msra.mxu0 0
        %377 = vmatprep.mubr.bf16.mxu0 0
        %378 = vmatmul.mubr.bf16.gmra.mrb[0].mxu0 %v300
        %v379 = vpop.f32.mrb[0].mxu0
        %v380 = vadd.f32 %v230, %v379
        %v381 = vpop.f32.mrb[0].mxu0
        %v382 = vpop.f32.mrb[0].mxu0
        %v383 = vadd.f32 %v230, %v382
        %v384 = vpop.f32.mrb[0].mxu0
        %385 = vdwg.mxu0
        %v386 = vpack.c.bf16 %v341, %v337
        %v387 = vpack.c.bf16 %v343, %v339
        %388 = vmatprep.subr.bf16.mxu0 0
        %389 = vmatpush1.bf16.xpose.msra.mxu0 %v387
        %390 = vmatprep.subr.bf16.mxu0 0
        %391 = vmatpush1.bf16.xpose.msra.mxu0 0
        %392 = vmatprep.subr.bf16.mxu0 0
        %393 = vmatpush1.bf16.xpose.msra.mxu0 0
        %394 = vmatprep.subr.bf16.mxu0 0
        %395 = vmatpush1.bf16.xpose.msra.mxu0 0
        %396 = vmatprep.subr.bf16.mxu0 0
        %397 = vmatpush1.bf16.xpose.msra.mxu0 0
        %398 = vmatprep.subr.bf16.mxu0 0
        %399 = vmatpush1.bf16.xpose.msra.mxu0 0
        %400 = vmatprep.subr.bf16.mxu0 0
        %401 = vmatpush1.bf16.xpose.msra.mxu0 0
        %402 = vmatprep.subr.bf16.mxu0 0
        %403 = vmatpush1.bf16.xpose.msra.mxu0 0
        %404 = vmatprep.subr.bf16.mxu0 0
        %405 = vmatpush1.bf16.xpose.msra.mxu0 0
        %406 = vmatprep.subr.bf16.mxu0 0
        %407 = vmatpush1.bf16.xpose.msra.mxu0 0
        %408 = vmatprep.subr.bf16.mxu0 0
        %409 = vmatpush1.bf16.xpose.msra.mxu0 0
        %410 = vmatprep.subr.bf16.mxu0 0
        %411 = vmatpush1.bf16.xpose.msra.mxu0 0
        %412 = vmatprep.subr.bf16.mxu0 0
        %413 = vmatpush1.bf16.xpose.msra.mxu0 0
        %414 = vmatprep.subr.bf16.mxu0 0
        %415 = vmatpush1.bf16.xpose.msra.mxu0 0
        %416 = vmatprep.subr.bf16.mxu0 0
        %417 = vmatpush1.bf16.xpose.msra.mxu0 0
        %418 = vmatprep.subr.bf16.mxu0 0
        %419 = vmatpush1.bf16.xpose.msra.mxu0 0
        %420 = vmatprep.mubr.bf16.mxu0 0
        %421 = vmatmul.mubr.bf16.gmra.mrb[0].mxu0 %v386
        %v422 = vpop.f32.mrb[0].mxu0
        %v423 = vadd.f32 0.0, %v422
        %v424 = vpop.f32.mrb[0].mxu0
        %v425 = vpop.f32.mrb[0].mxu0
        %v426 = vadd.f32 0.0, %v425
        %v427 = vpop.f32.mrb[0].mxu0
        %428 = vdwg.mxu0
        %vm429 = vcmask 130048
        %v430 = vsel %vm429, %v423, -inf
        %431 = vmax.xlane.f32.xlu0 %v430
        %v432 = vpop.xlane.xlu0 %431
        %v433 = vsel %vm429, %v426, -inf
        %434 = vmax.xlane.f32.xlu0 %v433
        %v435 = vpop.xlane.xlu0 %434
        %v436 = vsub.f32 %v423, %v432
        %v437 = vsub.f32 %v426, %v435
        %v438 = vmul.f32 %v436, 1.442695
        %v439 = vpow.pop %v438
        %v440 = vmul.f32 %v437, 1.442695
        %v441 = vpow.pop %v440
        %v442 = vsel %vm429, %v439, 0.0
        %443 = vadd.xlane.f32.xlu0 %v442
        %v444 = vpop.xlane.xlu0 %443
        %v445 = vsel %vm429, %v441, 0.0
        %446 = vadd.xlane.f32.xlu0 %v445
        %v447 = vpop.xlane.xlu0 %446
        %v448 = vrcp.pop %v444
        %v449 = vrcp.pop %v447
        %v450 = vmul.f32 %v439, %v448
        %v451 = vmul.f32 %v441, %v449
        %v452 = vpack.c.bf16 %v451, %v450
        %v453 = vpack.c.bf16 %v383, %v380
        %v455 = vsel %vm429, %v452, 0
        %457 = vmatprep.subr.bf16.mxu0 0
        %458 = vmatpush1.bf16.msra.mxu0 %v453
        %459 = vmatprep.subr.bf16.mxu0 0
        %460 = vmatpush1.bf16.msra.mxu0 0
        %461 = vmatprep.subr.bf16.mxu0 0
        %462 = vmatpush1.bf16.msra.mxu0 0
        %463 = vmatprep.subr.bf16.mxu0 0
        %464 = vmatpush1.bf16.msra.mxu0 0
        %465 = vmatprep.subr.bf16.mxu0 0
        %466 = vmatpush1.bf16.msra.mxu0 0
        %467 = vmatprep.subr.bf16.mxu0 0
        %468 = vmatpush1.bf16.msra.mxu0 0
        %469 = vmatprep.subr.bf16.mxu0 0
        %470 = vmatpush1.bf16.msra.mxu0 0
        %471 = vmatprep.subr.bf16.mxu0 0
        %472 = vmatpush1.bf16.msra.mxu0 0
        %473 = vmatprep.subr.bf16.mxu0 0
        %474 = vmatpush1.bf16.msra.mxu0 0
        %475 = vmatprep.subr.bf16.mxu0 0
        %476 = vmatpush1.bf16.msra.mxu0 0
        %477 = vmatprep.subr.bf16.mxu0 0
        %478 = vmatpush1.bf16.msra.mxu0 0
        %479 = vmatprep.subr.bf16.mxu0 0
        %480 = vmatpush1.bf16.msra.mxu0 0
        %481 = vmatprep.subr.bf16.mxu0 0
        %482 = vmatpush1.bf16.msra.mxu0 0
        %483 = vmatprep.subr.bf16.mxu0 0
        %484 = vmatpush1.bf16.msra.mxu0 0
        %485 = vmatprep.subr.bf16.mxu0 0
        %486 = vmatpush1.bf16.msra.mxu0 0
        %487 = vmatprep.subr.bf16.mxu0 0
        %488 = vmatpush1.bf16.msra.mxu0 0
        %489 = vmatprep.mubr.bf16.mxu0 0
        %490 = vmatmul.mubr.bf16.gmra.mrb[0].mxu0 %v455
        %v491 = vpop.f32.mrb[0].mxu0
        %v492 = vadd.f32 0.0, %v491
        %v493 = vpop.f32.mrb[0].mxu0
        %v494 = vpop.f32.mrb[0].mxu0
        %v495 = vadd.f32 0.0, %v494
        %v496 = vpop.f32.mrb[0].mxu0
        %497 = vdwg.mxu0
        %s498 = sld [smem:[#allocation2]]
        %v499 = vstv %s498
        %v500 = vmul.f32 %v499, %v492
        %v501 = vmul.f32 %v499, %v495
        %v502 = vadd.f32 %v500, %v198
        %v503 = vadd.f32 %v501, %v199
        %504 = vst.msk [vmem:[%s191] sm:$0xff] %vm298, %v502
        %505 = vst.msk [vmem:[%s191 + $0x8] sm:$0xff] %vm298, %v503
        %s506 = sand.u32 %s116, 1
        %s507 = scalar_lea.sflag [#allocation4], %s506
        %s508 = sand.u32 %s116, 1
        %s509 = smul.addr %s508, 16
        %s510 = scalar_lea.vmem [#allocation3], %s509
        // Predicated region
        $region37: #{self_attention.1} parent=35 // pred_check
          %p511 = pneg %p126
        $region38: #{self_attention.1} parent=35 // pred_check_branch
          %513 = sbr.rel (%p511) target = $region40
        $region39: #{self_attention.1} parent=35 // pred_region
          %s515 = ssub.s32 256, 256
          %516 = vsyncadd %s507, %s515
          %s517 = smul.addr %s19, 2
          %s518 = smul.addr %s517, 128
          %s519 = scalar_lea.hbm %s4, %s518
          %s520 = sshll.u32 %s510, 4
          %s521 = int_to_ptr.vmem [resolvable:$true] %s520
          %526 = dma.vmem_to_hbm [thread:$0]  %s521, 256, %s519, %s507, 128, 128, 8
        $region40: #{self_attention.1} parent=35 // pred_fallthru
          _
      $region36: #{self_attention.1} parent=5 // pred_fallthru
        _
      %p527 = scmp.le.s32.totalorder 2, %s14
      // Predicated region
      $region41: #{self_attention.1} parent=5 // pred_check
        %p528 = pneg %p527
      $region42: #{self_attention.1} parent=5 // pred_check_branch
        %530 = sbr.rel (%p528) target = $region44
      $region43: #{self_attention.1} parent=5 // pred_region
        %s531 = ssub.s32 %s14, 2
        // Predicated region
        $region45: #{self_attention.1} parent=43 // pred_check
          %p532 = pneg %p132
        $region46: #{self_attention.1} parent=43 // pred_check_branch
          %534 = sbr.rel (%p532) target = $region48
        $region47: #{self_attention.1} parent=43 // pred_region
          %s535 = sand.u32 %s117, 1
          %s536 = scalar_lea.sflag [#allocation4], %s535
          %s537 = sand.u32 %s117, 1
          %s538 = smul.addr %s537, 16
          %s539 = scalar_lea.vmem [#allocation3], %s538
          %540 = dma.done %s536, 256
        $region48: #{self_attention.1} parent=43 // pred_fallthru
          _
      $region44: #{self_attention.1} parent=5 // pred_fallthru
        _
    $region6: #{self_attention.1} parent=1 // loop_footer
      %s18 = sadd.s32 1, %s14
    $region7: #{self_attention.1} parent=1 // loop_footer_branch
      %13 = sbr.rel target = $region3
    $region8: #{self_attention.1} parent=1 // loop_exit
      _
    %541 = vsyncpa [#allocation4], 1
    %s542 = scalar_lea.sflag [#allocation4], 1
    %543 = vsyncpa %s542, 1

</llo_original>
